<compile_context>
chip_gen: v7x
topology: tpu7x:2x2x1
jax: 0.10.0
libtpu: 0.0.40
codegen_flags: <defaults>
</compile_context>

<pallas_src>
import functools

import numpy as np
import jax
import jax.numpy as jnp
from jax import lax
from jax.experimental import pallas as pl
from jax.experimental.pallas import tpu as pltpu


# Matmul operand dtype (f32 to satisfy the tight 2e-3 reference tolerance;
# set to jnp.bfloat16 for higher MXU throughput, accumulation stays f32).
MM_DTYPE = jnp.float32


def _mm(x):
    return x if x.dtype == MM_DTYPE else x.astype(MM_DTYPE)


# ----------------------------------------------------------------------------
# Bicubic interpolation matrices (PyTorch semantics: a=-0.75, align_corners=False)
# ----------------------------------------------------------------------------
def bicubic_weight_matrix(in_size: int, out_size: int) -> np.ndarray:
    A = -0.75
    scale = in_size / out_size  # align_corners=False scale

    def c1(x):  # |x| <= 1
        return ((A + 2.0) * x - (A + 3.0)) * x * x + 1.0

    def c2(x):  # 1 < |x| < 2
        return ((A * x - 5.0 * A) * x + 8.0 * A) * x - 4.0 * A

    M = np.zeros((out_size, in_size), dtype=np.float64)
    for o in range(out_size):
        src = (o + 0.5) * scale - 0.5
        i0 = int(np.floor(src))
        t = src - i0
        coeffs = [c2(t + 1.0), c1(t), c1(1.0 - t), c2(2.0 - t)]
        for k in range(4):
            idx = min(max(i0 - 1 + k, 0), in_size - 1)  # border replicate
            M[o, idx] += coeffs[k]
    return M.astype(np.float32)


def padded_row_matrix(in_size: int, out_size: int, pad: int) -> np.ndarray:
    # (out_size + 2*pad, in_size): bicubic row-interp with zero halo rows,
    # so the matmul directly produces the top/bottom-padded conv1 input.
    m = bicubic_weight_matrix(in_size, out_size)
    mp = np.zeros((out_size + 2 * pad, in_size), np.float32)
    mp[pad:pad + out_size] = m
    return mp


def padded_width_channel_matrix(in_size: int, out_size: int, C: int, CP: int,
                                pad: int) -> np.ndarray:
    # B[c*Win + wi, (pad + wo)*CP + c] = mw[wo, wi]; zero in the halo columns
    # and in the CP-C dummy channel lanes, so x_rows @ B directly yields the
    # zero-padded, channel-interleaved (lane-dense) conv1 input rows.
    mw = bicubic_weight_matrix(in_size, out_size)  # (Wout, Win)
    Wp = out_size + 2 * pad
    B = np.zeros((C, in_size, Wp, CP), np.float32)
    for c in range(C):
        B[c, :, pad:pad + out_size, c] = mw.T
    return B.reshape(C * in_size, Wp * CP)


# ----------------------------------------------------------------------------
# Kernel 1: batched bicubic upsample, emits the zero-padded conv1 input layout
# ----------------------------------------------------------------------------
def upsample_pad_kernel(x_ref, mh_ref, bw_ref, o_ref):
    # x_ref:  (1, Hin, C*Win)     one image, channel-interleaved rows
    # mh_ref: (Hp, Hin)           row interpolation (zero halo rows built in)
    # bw_ref: (C*Win, Wp*CP)      per-channel column interp (zero halo cols)
    # o_ref:  (1, Hp, Wp*CP)      zero-padded, lane-dense conv1 input
    a = jnp.dot(mh_ref[...], x_ref[0], preferred_element_type=jnp.float32)
    o_ref[0] = jnp.dot(a, bw_ref[...], preferred_element_type=jnp.float32)


def bicubic_upsample_pad(x_nchw, mh_pad, bw_pad, *, cp):
    N, C, Hin, Win = x_nchw.shape
    Hp = mh_pad.shape[0]
    WpCP = bw_pad.shape[1]
    # (N, C, Hin, Win) -> (N, Hin, C*Win): one tiny XLA transpose of the input.
    xt = jnp.transpose(x_nchw, (0, 2, 1, 3)).reshape(N, Hin, C * Win)
    out = pl.pallas_call(
        upsample_pad_kernel,
        out_shape=jax.ShapeDtypeStruct((N, Hp, WpCP), jnp.float32),
        grid=(N,),
        in_specs=[
            pl.BlockSpec((1, Hin, C * Win), lambda n: (n, 0, 0)),
            pl.BlockSpec((Hp, Hin), lambda n: (0, 0)),
            pl.BlockSpec((C * Win, WpCP), lambda n: (0, 0)),
        ],
        out_specs=pl.BlockSpec((1, Hp, WpCP), lambda n: (n, 0, 0)),
        compiler_params=pltpu.CompilerParams(dimension_semantics=("parallel",)),
    )(xt, mh_pad, bw_pad)
    # Free metadata reshape: same HBM bytes viewed as zero-padded NHWC
    # (channel dim padded 3 -> CP=4 lanes; extra lane is exactly zero).
    return out.reshape(N, Hp, WpCP // cp, cp)


# ----------------------------------------------------------------------------
# Kernel 2: fused conv1(9x9,3->64)+ReLU + conv2(1x1,64->32)+ReLU + conv3(5x5,32->3)
# ----------------------------------------------------------------------------
def conv123_kernel(xp_ref, w1_ref, b1_ref, w2_ref, b2_ref, w3_ref, b3_ref,
                   o_ref, col1_ref, mid_ref, col3_ref,
                   *, H, W, CP, C1, C2, C3, K1, K3, P3, TH):
    # xp_ref:  (1, H+K1-1, W+K1-1, CP)   zero-padded upsampled image
    # w1_ref:  (K1*K1*CP, C1)            conv1 weights, contraction = (kh,kw,c)
    # w2_ref:  (C1, C2);  w3_ref: (C3p, K3*K3*C2)  (rows padded to 8)
    # o_ref:   (1, C3, H*W)              channel-major, pixels on lanes
    # col1/col3: per-band im2col scratch; mid: zero-padded conv2 output (VMEM)

    # Hoist weight/bias loads out of the band loops (JAX does not CSE the
    # broadcast_in_dim, so per-iteration reads would re-materialize it).
    w1 = w1_ref[...]
    b1 = b1_ref[...]
    w2 = w2_ref[...]
    b2 = b2_ref[...]
    w3 = w3_ref[...]
    b3 = b3_ref[...]

    Wp3 = W + 2 * P3

    # Zero only the halo strips of the conv3 input scratch; the interior is
    # fully overwritten by the conv1/conv2 band loop below.
    mid_ref[:P3, :, :] = jnp.zeros((P3, Wp3, C2), jnp.float32)
    mid_ref[P3 + H:, :, :] = jnp.zeros((P3, Wp3, C2), jnp.float32)
    mid_ref[P3:P3 + H, :P3, :] = jnp.zeros((H, P3, C2), jnp.float32)
    mid_ref[P3:P3 + H, P3 + W:, :] = jnp.zeros((H, P3, C2), jnp.float32)

    # ---- conv1 (9x9, CP->C1) + ReLU + conv2 (1x1, C1->C2) + ReLU ----------
    for h0 in range(0, H, TH):              # static band loop (unrolled)
        # Full (kh, kw, c) im2col for this band.  CP=4 keeps every destination
        # lane group 4-aligned (never crosses a 128-lane tile boundary).
        for kh in range(K1):
            for kw in range(K1):
                t0 = (kh * K1 + kw) * CP
                col1_ref[:, :, t0:t0 + CP] = (
                    xp_ref[0, h0 + kh:h0 + kh + TH, kw:kw + W, :])
        # ONE deep matmul per band: (TH*W, 324) x (324, 64).
        lhs1 = _mm(col1_ref[...].reshape(TH * W, K1 * K1 * CP))
        h1 = jnp.dot(lhs1, w1, preferred_element_type=jnp.float32)
        h1 = jnp.maximum(h1 + b1, 0.0)
        # Fused 1x1 conv2 (+bias+ReLU): the 64-wide tensor never leaves VMEM.
        y2 = jnp.dot(_mm(h1), w2, preferred_element_type=jnp.float32)
        y2 = jnp.maximum(y2 + b2, 0.0)
        mid_ref[P3 + h0:P3 + h0 + TH, P3:P3 + W, :] = y2.reshape(TH, W, C2)

    # ---- conv3 (5x5, C2->C3): weight-stationary, lane-dense output --------
    for h0 in range(0, H, TH):
        for kh in range(K3):
            for kw in range(K3):
                t0 = (kh * K3 + kw) * C2
                col3_ref[:, :, t0:t0 + C2] = (
                    mid_ref[h0 + kh:h0 + kh + TH, kw:kw + W, :])
        lhs3 = _mm(col3_ref[...].reshape(TH * W, K3 * K3 * C2))
        # (C3p, 800) x (TH*W, 800)^T -> (C3p, TH*W): fills the output lanes
        # densely; no result transpose, no masked 3/128-lane store.
        y3 = lax.dot_general(w3, lhs3, (((1,), (1,)), ((), ())),
                             preferred_element_type=jnp.float32)
        o_ref[0, :, h0 * W:(h0 + TH) * W] = y3[:C3] + b3


def conv123_fused(xp1, w1r, b1, w2r, b2, w3r, b3, *, H, W):
    N, Hp1, Wp1, CP = xp1.shape
    K1 = Hp1 - H + 1
    C1 = w1r.shape[-1]
    C2 = w2r.shape[-1]
    C3 = b3.shape[0]
    C3p = w3r.shape[0]
    K3 = int(round((w3r.shape[1] // C2) ** 0.5))
    P3 = (K3 - 1) // 2
    assert w1r.shape[0] == K1 * K1 * CP
    TH = 32 if H % 32 == 0 else H            # row band height
    assert H % TH == 0

    kernel = functools.partial(conv123_kernel, H=H, W=W, CP=CP, C1=C1, C2=C2,
                               C3=C3, K1=K1, K3=K3, P3=P3, TH=TH)
    out = pl.pallas_call(
        kernel,
        out_shape=jax.ShapeDtypeStruct((N, C3, H * W), jnp.float32),
        grid=(N,),
        in_specs=[
            pl.BlockSpec((1, Hp1, Wp1, CP), lambda n: (n, 0, 0, 0)),
            pl.BlockSpec((K1 * K1 * CP, C1), lambda n: (0, 0)),
            pl.BlockSpec((1, C1), lambda n: (0, 0)),
            pl.BlockSpec((C1, C2), lambda n: (0, 0)),
            pl.BlockSpec((1, C2), lambda n: (0, 0)),
            pl.BlockSpec((C3p, K3 * K3 * C2), lambda n: (0, 0)),
            pl.BlockSpec((C3, 1), lambda n: (0, 0)),
        ],
        out_specs=pl.BlockSpec((1, C3, H * W), lambda n: (n, 0, 0)),
        scratch_shapes=[
            pltpu.VMEM((TH, W, K1 * K1 * CP), jnp.float32),          # conv1 im2col
            pltpu.VMEM((H + 2 * P3, W + 2 * P3, C2), jnp.float32),   # padded conv2 out
            pltpu.VMEM((TH, W, K3 * K3 * C2), jnp.float32),          # conv3 im2col
        ],
        compiler_params=pltpu.CompilerParams(
            dimension_semantics=("parallel",),
            vmem_limit_bytes=48 * 1024 * 1024),
    )(xp1, w1r, b1, w2r, b2, w3r, b3)
    return out.reshape(N, C3, H, W)


# ----------------------------------------------------------------------------
# SRCNN forward
# ----------------------------------------------------------------------------
def srcnn_forward(x_nchw, kp, scale: int):
    N, C, Hin, Win = x_nchw.shape
    H, W = Hin * scale, Win * scale
    P1, CP = 4, 4  # conv1 padding; input channel dim padded 3 -> 4 lanes
    mh_pad = jnp.asarray(padded_row_matrix(Hin, H, P1))
    bw_pad = jnp.asarray(padded_width_channel_matrix(Win, W, C, CP, P1))
    # 1) bicubic upsample -> zero-padded, lane-dense conv1 input
    xp1 = bicubic_upsample_pad(x_nchw, mh_pad, bw_pad, cp=CP)
    # 2) fused conv1 + ReLU + conv2 + ReLU + conv3 -> (N, 3, H, W)
    return conv123_fused(xp1, kp["w1r"], kp["b1"], kp["w2r"], kp["b2"],
                         kp["w3r"], kp["b3"], H=H, W=W)


# ----------------------------------------------------------------------------
# Parameters, reference, test
# ----------------------------------------------------------------------------
def init_params(key):
    def conv_init(k, cout, cin, ksz):
        kw_, kb_ = jax.random.split(k)
        bound = 1.0 / np.sqrt(cin * ksz * ksz)
        w = jax.random.uniform(kw_, (cout, cin, ksz, ksz), jnp.float32,
                               -bound, bound)
        b = jax.random.uniform(kb_, (cout,), jnp.float32, -bound, bound)
        return w, b

    k1, k2, k3 = jax.random.split(key, 3)
    w1, b1 = conv_init(k1, 64, 3, 9)
    w2, b2 = conv_init(k2, 32, 64, 1)
    w3, b3 = conv_init(k3, 3, 32, 5)
    return {"w1": w1, "b1": b1, "w2": w2, "b2": b2, "w3": w3, "b3": b3}


def prepare_kernel_params(p, *, cp=4, c3_rows=8):
    # conv1: OIHW -> (K1*K1*CP, O) with contraction order (kh, kw, c); the
    # dummy channel (c = 3) rows are zero.
    w1 = p["w1"]
    O1, I1, K1, _ = w1.shape
    w1t = jnp.transpose(w1, (2, 3, 1, 0))                 # (K1, K1, I1, O1)
    w1t = jnp.pad(w1t, ((0, 0), (0, 0), (0, cp - I1), (0, 0)))
    w1r = w1t.reshape(K1 * K1 * cp, O1).astype(MM_DTYPE)

    w2r = jnp.transpose(p["w2"][:, :, 0, 0], (1, 0)).astype(MM_DTYPE)

    # conv3: OIHW -> weight-stationary (O, K3*K3*I), rows zero-padded to 8
    # so the MXU sees a full sublane tile on the M side.
    w3 = p["w3"]
    O3, I3, K3, _ = w3.shape
    w3t = jnp.transpose(w3, (0, 2, 3, 1)).reshape(O3, K3 * K3 * I3)
    w3r = jnp.pad(w3t, ((0, c3_rows - O3), (0, 0))).astype(MM_DTYPE)

    return {
        "w1r": w1r, "b1": p["b1"].reshape(1, -1),
        "w2r": w2r, "b2": p["b2"].reshape(1, -1),
        "w3r": w3r, "b3": p["b3"].reshape(-1, 1),
    }


def reference_forward(x_nchw, p, scale: int):
    """Pure-JAX reference (same bicubic matrices, lax.conv for the convs)."""
    N, C, Hin, Win = x_nchw.shape
    mh = jnp.asarray(bicubic_weight_matrix(Hin, Hin * scale))
    mw = jnp.asarray(bicubic_weight_matrix(Win, Win * scale))
    x = jnp.einsum("oh,nchw->ncow", mh, x_nchw, precision=lax.Precision.HIGHEST)
    x = jnp.einsum("pw,ncow->ncop", mw, x, precision=lax.Precision.HIGHEST)

    def conv(x, w, b, pad):
        y = lax.conv_general_dilated(
            x, w, (1, 1), [(pad, pad), (pad, pad)],
            dimension_numbers=("NCHW", "OIHW", "NCHW"),
            precision=lax.Precision.HIGHEST)
        return y + b[None, :, None, None]

    x = jax.nn.relu(conv(x, p["w1"], p["b1"], 4))
    x = jax.nn.relu(conv(x, p["w2"], p["b2"], 0))
    return conv(x, p["w3"], p["b3"], 2)


if __name__ == "__main__":
    scale = 2  # args.scale[0]
    key = jax.random.PRNGKey(0)
    k_params, k_x = jax.random.split(key)
    torch_params = init_params(k_params)
    kparams = prepare_kernel_params(torch_params)

    x = jax.random.normal(k_x, (2, 3, 16, 16), jnp.float32)  # NCHW, 3 channels

    out = jax.block_until_ready(srcnn_forward(x, kparams, scale))
    assert out.shape == (2, 3, 16 * scale, 16 * scale), out.shape
    assert out.dtype == jnp.float32

    ref = jax.block_until_ready(reference_forward(x, torch_params, scale))
    max_err = float(jnp.max(jnp.abs(out - ref)))
    assert jnp.allclose(out, ref, atol=2e-3, rtol=2e-3), max_err

    print("KERNEL_OK")
</pallas_src>

<mosaic_0001>
module attributes {stable_mosaic.version = 11 : i64} {
  func.func @upsample_pad_kernel(%arg0: i32, %arg1: memref<1x16x48xf32, #tpu.memory_space<vmem>>, %arg2: memref<40x16xf32, #tpu.memory_space<vmem>>, %arg3: memref<48x160xf32, #tpu.memory_space<vmem>>, %arg4: memref<1x40x160xf32, #tpu.memory_space<vmem>>) attributes {dimension_semantics = [#tpu.dimension_semantics<parallel>], iteration_bounds = array<i64: 2>, scalar_prefetch = 0 : i64, scratch_operands = 0 : i64, tpu.core_type = #tpu.core_type<tc>, window_params = [{transform_indices = @transform_0, window_bounds = array<i64: 1, 16, 48>}, {pipeline_mode = #tpu.pipeline_mode<synchronous>, transform_indices = @transform_1, window_bounds = array<i64: 40, 16>}, {pipeline_mode = #tpu.pipeline_mode<synchronous>, transform_indices = @transform_2, window_bounds = array<i64: 48, 160>}, {transform_indices = @transform_3, window_bounds = array<i64: 1, 40, 160>}]} {
    %c0 = arith.constant 0 : index
    %c0_0 = arith.constant 0 : index
    %0 = vector.load %arg2[%c0, %c0_0] : memref<40x16xf32, #tpu.memory_space<vmem>>, vector<40x16xf32>
    %c0_1 = arith.constant 0 : index
    %c0_2 = arith.constant 0 : index
    %c0_3 = arith.constant 0 : index
    %1 = vector.load %arg1[%c0_1, %c0_2, %c0_3] : memref<1x16x48xf32, #tpu.memory_space<vmem>>, vector<1x16x48xf32>
    %2 = vector.shape_cast %1 : vector<1x16x48xf32> to vector<16x48xf32>
    %cst = arith.constant dense<0.000000e+00> : vector<40x48xf32>
    %3 = tpu.matmul %0, %2, %cst {dimension_numbers = #tpu.dot_dimension_numbers<[1], [0], [0], [1], [0, 0, 1, 1], [], []>} : vector<40x16xf32>, vector<16x48xf32>, vector<40x48xf32> -> vector<40x48xf32>
    %c0_4 = arith.constant 0 : index
    %c0_5 = arith.constant 0 : index
    %4 = vector.load %arg3[%c0_4, %c0_5] : memref<48x160xf32, #tpu.memory_space<vmem>>, vector<48x160xf32>
    %cst_6 = arith.constant dense<0.000000e+00> : vector<40x160xf32>
    %5 = tpu.matmul %3, %4, %cst_6 {dimension_numbers = #tpu.dot_dimension_numbers<[1], [0], [0], [1], [0, 0, 1, 1], [], []>} : vector<40x48xf32>, vector<48x160xf32>, vector<40x160xf32> -> vector<40x160xf32>
    %c0_7 = arith.constant 0 : index
    %c0_8 = arith.constant 0 : index
    %c0_9 = arith.constant 0 : index
    %6 = vector.load %arg4[%c0_7, %c0_8, %c0_9] : memref<1x40x160xf32, #tpu.memory_space<vmem>>, vector<1x40x160xf32>
    %7 = vector.shape_cast %6 : vector<1x40x160xf32> to vector<40x160xf32>
    %8 = vector.shape_cast %5 : vector<40x160xf32> to vector<1x40x160xf32>
    tpu.vector_store %arg4[%c0_7, %c0_8, %c0_9], %8 {strides = array<i32>} : memref<1x40x160xf32, #tpu.memory_space<vmem>>, vector<1x40x160xf32>,
    return
  }
  func.func @transform_0(%arg0: i32) -> (i32, i32, i32) {
    %c0_i32 = arith.constant 0 : i32
    %c0_i32_0 = arith.constant 0 : i32
    %c0_i32_1 = arith.constant 0 : i32
    return %arg0, %c0_i32, %c0_i32_0 : i32, i32, i32
  }
  func.func @transform_1(%arg0: i32) -> (i32, i32) {
    %c0_i32 = arith.constant 0 : i32
    %c0_i32_0 = arith.constant 0 : i32
    %c0_i32_1 = arith.constant 0 : i32
    return %c0_i32, %c0_i32_0 : i32, i32
  }
  func.func @transform_2(%arg0: i32) -> (i32, i32) {
    %c0_i32 = arith.constant 0 : i32
    %c0_i32_0 = arith.constant 0 : i32
    %c0_i32_1 = arith.constant 0 : i32
    return %c0_i32, %c0_i32_0 : i32, i32
  }
  func.func @transform_3(%arg0: i32) -> (i32, i32, i32) {
    %c0_i32 = arith.constant 0 : i32
    %c0_i32_0 = arith.constant 0 : i32
    %c0_i32_1 = arith.constant 0 : i32
    return %arg0, %c0_i32, %c0_i32_0 : i32, i32, i32
  }
}

</mosaic_0001>

<llo_original>
// kernel: tpu_custom_call.1
$region0: #{tpu_custom_call.1}
  #allocation0 [shape = 'u32[]', space=smem, size = 0x4, offset = 0x4, fixed_abs, tag = 'smem constant byte address 0x4 - core index']
  #allocation1 [shape = 'u32[144,128]{1,0:T(1,128)}', space=vmem, size = 0x12000, scoped, tag = 'internal scratch']
  %s0 = inlined_call_operand.vmem [shape: f32[2,16,48], index: 0, kind: input, shape index: {}]
  %s1 = inlined_call_operand.vmem [shape: f32[40,16], index: 1, kind: input, shape index: {}]
  %s2 = inlined_call_operand.hbm [shape: f32[48,160], index: 2, kind: input, shape index: {}]
  %s3 = inlined_call_operand.hbm [shape: f32[2,40,160], index: 3, kind: output, shape index: {}]
  %s4 = sld [smem:[#allocation0]]
  $region49: #{tpu_custom_call.1} parent=0
    _
  %s6 = ssub.s32 1, %s4
  %s7 = scalar_select 0, %s6, %s4
  $region1: #{tpu_custom_call.1} parent=0
    #allocation2 [shape = 'u8[49152]{0}', space=vmem, size = 0xc000, scoped, tag = 'input window, operand 2, single buffered']
    #allocation3 [shape = 's32[2]{0}', space=sflag, size = 0x8, scoped, tag = 'scoped memory for tpu_custom_call.1']
    #allocation4 [shape = 's32[2]{0}', space=sflag, size = 0x8, scoped, tag = 'scoped memory for tpu_custom_call.1']
    #allocation5 [shape = 'u8[81920]{0}', space=vmem, size = 0x14000, scoped, tag = 'output window, operand 0']
    %8 = vsyncpa [#allocation3], 0
    %9 = vsyncpa [#allocation4], 0
    %s10 = scalar_lea.sflag [#allocation4], 1
    %11 = vsyncpa %s10, 0
    loop: start=0, step=1, limit=4
    $region2: #{tpu_custom_call.1} parent=1 // loop_pre_header
      _
    $region3: #{tpu_custom_call.1} parent=1 // loop_header
      %s13 = sphi 0, %s17
      %p14 = scmp.ge.s32.totalorder %s13, 4
      %s23 = sphi 0, %s25
      %s26 = sphi 0, %s23
      %s27 = sphi 0, %s26
      %s43 = sphi 0, %s27
      %s47 = sphi 0, %s47
      %s49 = sphi 0, %s47
      %s50 = sphi 0, %s49
      %s64 = sphi 0, %s50
      %s68 = sphi 0, %s68
      %s70 = sphi 0, %s68
      %s71 = sphi 0, %s70
      %s85 = sphi 0, %s71
      %s91 = sphi 0, %s93
      %s94 = sphi 0, %s91
      %s95 = sphi 0, %s94
      %s111 = sphi 0, %s95
    $region4: #{tpu_custom_call.1} parent=1 // loop_header_branch
      %16 = sbr.rel (%p14) target = $region8
    $region5: #{tpu_custom_call.1} parent=1 // loop_body
      %s18 = ssub.s32 %s13, 1
      %s19 = ssub.s32 %s13, 2
      %s20 = sadd.s32 %s13, 1
      %s21 = ssub.s32 %s13, %s20
      %p22 = scmp.eq.s32.totalorder %s21, 0
      %s24 = sadd.s32 %s23, 1
      %s25 = scalar_select %p22, %s23, %s24
      %p28 = pneg %p22
      %p29 = scmp.eq.s32.totalorder %s13, 1
      %p30 = por %p28, %p29
      %p31 = scmp.ne.s32.totalorder %s23, %s26
      %p32 = scmp.eq.s32.totalorder %s13, 0
      %p33 = por %p31, %p32
      %p34 = scmp.ne.s32.totalorder %s23, %s26
      %p35 = scmp.eq.s32.totalorder %s18, 1
      %p36 = por %p34, %p35
      %p37 = scmp.ne.s32.totalorder %s26, %s27
      %p38 = scmp.eq.s32.totalorder %s18, 0
      %p39 = por %p37, %p38
      %p40 = scmp.ne.s32.totalorder %s26, %s27
      %p41 = scmp.eq.s32.totalorder %s19, 1
      %p42 = por %p40, %p41
      %p44 = scmp.ne.s32.totalorder %s27, %s43
      %p45 = scmp.eq.s32.totalorder %s19, 0
      %p46 = por %p44, %p45
      %s48 = sadd.s32 %s47, 1
      %p51 = scmp.eq.s32.totalorder %s13, 1
      %p52 = scmp.ne.s32.totalorder %s47, %s49
      %p53 = scmp.eq.s32.totalorder %s13, 0
      %p54 = por %p52, %p53
      %p55 = scmp.ne.s32.totalorder %s47, %s49
      %p56 = scmp.eq.s32.totalorder %s18, 1
      %p57 = por %p55, %p56
      %p58 = scmp.ne.s32.totalorder %s49, %s50
      %p59 = scmp.eq.s32.totalorder %s18, 0
      %p60 = por %p58, %p59
      %p61 = scmp.ne.s32.totalorder %s49, %s50
      %p62 = scmp.eq.s32.totalorder %s19, 1
      %p63 = por %p61, %p62
      %p65 = scmp.ne.s32.totalorder %s50, %s64
      %p66 = scmp.eq.s32.totalorder %s19, 0
      %p67 = por %p65, %p66
      %s69 = sadd.s32 %s68, 1
      %p72 = scmp.eq.s32.totalorder %s13, 1
      %p73 = scmp.ne.s32.totalorder %s68, %s70
      %p74 = scmp.eq.s32.totalorder %s13, 0
      %p75 = por %p73, %p74
      %p76 = scmp.ne.s32.totalorder %s68, %s70
      %p77 = scmp.eq.s32.totalorder %s18, 1
      %p78 = por %p76, %p77
      %p79 = scmp.ne.s32.totalorder %s70, %s71
      %p80 = scmp.eq.s32.totalorder %s18, 0
      %p81 = por %p79, %p80
      %p82 = scmp.ne.s32.totalorder %s70, %s71
      %p83 = scmp.eq.s32.totalorder %s19, 1
      %p84 = por %p82, %p83
      %p86 = scmp.ne.s32.totalorder %s71, %s85
      %p87 = scmp.eq.s32.totalorder %s19, 0
      %p88 = por %p86, %p87
      %s89 = ssub.s32 %s13, %s20
      %p90 = scmp.eq.s32.totalorder %s89, 0
      %s92 = sadd.s32 %s91, 1
      %s93 = scalar_select %p90, %s91, %s92
      %p96 = pneg %p90
      %p97 = scmp.eq.s32.totalorder %s13, 1
      %p98 = por %p96, %p97
      %p99 = scmp.ne.s32.totalorder %s91, %s94
      %p100 = scmp.eq.s32.totalorder %s13, 0
      %p101 = por %p99, %p100
      %p102 = scmp.ne.s32.totalorder %s91, %s94
      %p103 = scmp.eq.s32.totalorder %s18, 1
      %p104 = por %p102, %p103
      %p105 = scmp.ne.s32.totalorder %s94, %s95
      %p106 = scmp.eq.s32.totalorder %s18, 0
      %p107 = por %p105, %p106
      %p108 = scmp.ne.s32.totalorder %s94, %s95
      %p109 = scmp.eq.s32.totalorder %s19, 1
      %p110 = por %p108, %p109
      %p112 = scmp.ne.s32.totalorder %s95, %s111
      %p113 = scmp.eq.s32.totalorder %s19, 0
      %p114 = por %p112, %p113
      %p115 = scmp.le.s32.totalorder 1, %s13
      %p116 = scmp.lt.s32.totalorder %s13, 3
      %p117 = pnand %p115, %p116
      %p118 = pneg %p117
      // Predicated region
      $region9: #{tpu_custom_call.1} parent=5 // pred_check
        _
      $region10: #{tpu_custom_call.1} parent=5 // pred_check_branch
        %120 = sbr.rel (%p117) target = $region12
      $region11: #{tpu_custom_call.1} parent=5 // pred_region
        %s121 = ssub.s32 %s13, 1
        // Predicated region
        $region13: #{tpu_custom_call.1} parent=11 // pred_check
          %p122 = pneg %p60
        $region14: #{tpu_custom_call.1} parent=11 // pred_check_branch
          %124 = sbr.rel (%p122) target = $region16
        $region15: #{tpu_custom_call.1} parent=11 // pred_region
          _
        $region16: #{tpu_custom_call.1} parent=11 // pred_fallthru
          _
        // Predicated region
        $region17: #{tpu_custom_call.1} parent=11 // pred_check
          %p125 = pneg %p81
        $region18: #{tpu_custom_call.1} parent=11 // pred_check_branch
          %127 = sbr.rel (%p125) target = $region20
        $region19: #{tpu_custom_call.1} parent=11 // pred_region
          %s129 = ssub.s32 1536, 1536
          %130 = vsyncadd [#allocation3], %s129
          %s131 = sshll.u32 [#allocation2], 4
          %s132 = int_to_ptr.vmem [resolvable:$true] %s131
          %137 = dma.hbm_to_vmem [thread:$0]  %s2, 1536, %s132, [#allocation3], 256, 256, 16
        $region20: #{tpu_custom_call.1} parent=11 // pred_fallthru
          _
      $region12: #{tpu_custom_call.1} parent=5 // pred_fallthru
        _
      %p138 = scmp.lt.s32.totalorder %s13, 2
      // Predicated region
      $region21: #{tpu_custom_call.1} parent=5 // pred_check
        %p139 = pneg %p138
      $region22: #{tpu_custom_call.1} parent=5 // pred_check_branch
        %141 = sbr.rel (%p139) target = $region24
      $region23: #{tpu_custom_call.1} parent=5 // pred_region
        // Predicated region
        $region25: #{tpu_custom_call.1} parent=23 // pred_check
          %p142 = pneg %p33
        $region26: #{tpu_custom_call.1} parent=23 // pred_check_branch
          %144 = sbr.rel (%p142) target = $region28
        $region27: #{tpu_custom_call.1} parent=23 // pred_region
          %p145 = scmp.lt.s32.totalorder %s13, 1
          %s146 = scalar_select %p145, %s13, 1
          %s147 = smul.addr %s146, 2
          %s148 = smul.addr %s147, 8
          %s149 = scalar_lea.vmem %s0, %s148
        $region28: #{tpu_custom_call.1} parent=23 // pred_fallthru
          _
      $region24: #{tpu_custom_call.1} parent=5 // pred_fallthru
        _
      %p150 = scmp.le.s32.totalorder 1, %s13
      %p151 = scmp.lt.s32.totalorder %s13, 3
      %p152 = pnand %p150, %p151
      %p153 = pneg %p152
      // Predicated region
      $region29: #{tpu_custom_call.1} parent=5 // pred_check
        _
      $region30: #{tpu_custom_call.1} parent=5 // pred_check_branch
        %155 = sbr.rel (%p152) target = $region32
      $region31: #{tpu_custom_call.1} parent=5 // pred_region
        %s156 = ssub.s32 %s13, 1
        // Predicated region
        $region33: #{tpu_custom_call.1} parent=31 // pred_check
          %p157 = pneg %p81
        $region34: #{tpu_custom_call.1} parent=31 // pred_check_branch
          %159 = sbr.rel (%p157) target = $region36
        $region35: #{tpu_custom_call.1} parent=31 // pred_region
          %160 = dma.done [#allocation3], 1536
        $region36: #{tpu_custom_call.1} parent=31 // pred_fallthru
          _
        %p161 = scmp.lt.s32.totalorder %s18, 1
        %s162 = scalar_select %p161, %s18, 1
        %s163 = smul.addr %s162, 2
        %s164 = smul.addr %s163, 8
        %s165 = scalar_lea.vmem %s0, %s164
        %p166 = pneg %p39
        %p167 = pneg %p36
        %p168 = pneg %p60
        %p169 = pneg %p57
        %p170 = pneg %p81
        %p171 = pneg %p78
        %p172 = pneg %p107
        %p173 = pneg %p104
        %s174 = sand.u32 %s94, 1
        %s175 = scalar_lea.sflag [#allocation4], %s174
        %s176 = sand.u32 %s94, 1
        %s177 = smul.addr %s176, 80
        %s178 = scalar_lea.vmem [#allocation5], %s177
        %p179 = scmp.lt.s32.totalorder %s18, 1
        %s180 = scalar_select %p179, %s18, 1
        %s181 = smul.addr %s180, 2
        %s182 = smul.addr %s181, 8
        %s183 = scalar_lea.vmem %s0, %s182
        %v184 = vld [vmem:[%s1] sm:$0xff]
        %v185 = vld [vmem:[%s1 + $0x8] sm:$0xff]
        %v186 = vld [vmem:[%s1 + $0x10] sm:$0xff]
        %v187 = vld [vmem:[%s1 + $0x18] sm:$0xff]
        %v188 = vld [vmem:[%s1 + $0x20] sm:$0xff]
        %v189 = vld [vmem:[%s183] sm:$0xff]
        %v190 = vld [vmem:[%s183 + $0x8] sm:$0xff]
        %vm191 = vcmask 130048
        %v193 = vsel %vm191, %v184, 0
        %v196 = vsel %vm191, %v185, 0
        %v199 = vsel %vm191, %v186, 0
        %v202 = vsel %vm191, %v187, 0
        %v205 = vsel %vm191, %v188, 0
        %207 = vmatprep.subr.mxu0 0.0
        %208 = vmatpush1.msra.mxu0 %v189
        %209 = vmatprep.subr.mxu0 0.0
        %210 = vmatpush1.msra.mxu0 %v190
        %211 = vmatprep.subr.mxu0 0.0
        %212 = vmatpush1.msra.mxu0 0.0
        %213 = vmatprep.subr.mxu0 0.0
        %214 = vmatpush1.msra.mxu0 0.0
        %215 = vmatprep.subr.mxu0 0.0
        %216 = vmatpush1.msra.mxu0 0.0
        %217 = vmatprep.subr.mxu0 0.0
        %218 = vmatpush1.msra.mxu0 0.0
        %219 = vmatprep.subr.mxu0 0.0
        %220 = vmatpush1.msra.mxu0 0.0
        %221 = vmatprep.subr.mxu0 0.0
        %222 = vmatpush1.msra.mxu0 0.0
        %223 = vmatprep.subr.mxu0 0.0
        %224 = vmatpush1.msra.mxu0 0.0
        %225 = vmatprep.subr.mxu0 0.0
        %226 = vmatpush1.msra.mxu0 0.0
        %227 = vmatprep.subr.mxu0 0.0
        %228 = vmatpush1.msra.mxu0 0.0
        %229 = vmatprep.subr.mxu0 0.0
        %230 = vmatpush1.msra.mxu0 0.0
        %231 = vmatprep.subr.mxu0 0.0
        %232 = vmatpush1.msra.mxu0 0.0
        %233 = vmatprep.subr.mxu0 0.0
        %234 = vmatpush1.msra.mxu0 0.0
        %235 = vmatprep.subr.mxu0 0.0
        %236 = vmatpush1.msra.mxu0 0.0
        %237 = vmatprep.subr.mxu0 0.0
        %238 = vmatpush1.msra.mxu0 0.0
        %239 = vmatprep.subr.mxu0 0.0
        %240 = vmatpush1.msra.mxu0 0.0
        %241 = vmatprep.subr.mxu0 0.0
        %242 = vmatpush1.msra.mxu0 0.0
        %243 = vmatprep.subr.mxu0 0.0
        %244 = vmatpush1.msra.mxu0 0.0
        %245 = vmatprep.subr.mxu0 0.0
        %246 = vmatpush1.msra.mxu0 0.0
        %247 = vmatprep.subr.mxu0 0.0
        %248 = vmatpush1.msra.mxu0 0.0
        %249 = vmatprep.subr.mxu0 0.0
        %250 = vmatpush1.msra.mxu0 0.0
        %251 = vmatprep.subr.mxu0 0.0
        %252 = vmatpush1.msra.mxu0 0.0
        %253 = vmatprep.subr.mxu0 0.0
        %254 = vmatpush1.msra.mxu0 0.0
        %255 = vmatprep.subr.mxu0 0.0
        %256 = vmatpush1.msra.mxu0 0.0
        %257 = vmatprep.subr.mxu0 0.0
        %258 = vmatpush1.msra.mxu0 0.0
        %259 = vmatprep.subr.mxu0 0.0
        %260 = vmatpush1.msra.mxu0 0.0
        %261 = vmatprep.subr.mxu0 0.0
        %262 = vmatpush1.msra.mxu0 0.0
        %263 = vmatprep.subr.mxu0 0.0
        %264 = vmatpush1.msra.mxu0 0.0
        %265 = vmatprep.subr.mxu0 0.0
        %266 = vmatpush1.msra.mxu0 0.0
        %267 = vmatprep.subr.mxu0 0.0
        %268 = vmatpush1.msra.mxu0 0.0
        %269 = vmatprep.subr.mxu0 0.0
        %270 = vmatpush1.msra.mxu0 0.0
        %271 = vmatprep.mubr.f32.mxu0 0.0
        %272 = vmatmul.mubr.f32.gmra.mrb[0].mxu0 %v193
        %v273 = vpop.f32.mrb[0].mxu0
        %v274 = vadd.f32 0.0, %v273
        %v275 = vpop.f32.mrb[0].mxu0
        %276 = vmatprep.mubr.f32.mxu0 0.0
        %277 = vmatmul.mubr.f32.gmra.mrb[0].mxu0 %v196
        %v278 = vpop.f32.mrb[0].mxu0
        %v279 = vadd.f32 0.0, %v278
        %v280 = vpop.f32.mrb[0].mxu0
        %281 = vmatprep.mubr.f32.mxu0 0.0
        %282 = vmatmul.mubr.f32.gmra.mrb[0].mxu0 %v199
        %v283 = vpop.f32.mrb[0].mxu0
        %v284 = vadd.f32 0.0, %v283
        %v285 = vpop.f32.mrb[0].mxu0
        %286 = vmatprep.mubr.f32.mxu0 0.0
        %287 = vmatmul.mubr.f32.gmra.mrb[0].mxu0 %v202
        %v288 = vpop.f32.mrb[0].mxu0
        %v289 = vadd.f32 0.0, %v288
        %v290 = vpop.f32.mrb[0].mxu0
        %291 = vmatprep.mubr.f32.mxu0 0.0
        %292 = vmatmul.mubr.f32.gmra.mrb[0].mxu0 %v205
        %v293 = vpop.f32.mrb[0].mxu0
        %v294 = vadd.f32 0.0, %v293
        %v295 = vpop.f32.mrb[0].mxu0
        %296 = vdwg.mxu0
        %v297 = vld [vmem:[#allocation2] sm:$0xff]
        %v298 = vld [vmem:[#allocation2 + $0x8] sm:$0xff]
        %v299 = vld [vmem:[#allocation2 + $0x10] sm:$0xff]
        %v300 = vld [vmem:[#allocation2 + $0x18] sm:$0xff]
        %v301 = vld [vmem:[#allocation2 + $0x20] sm:$0xff]
        %v302 = vld [vmem:[#allocation2 + $0x28] sm:$0xff]
        %v303 = vld [vmem:[#allocation2 + $0x30] sm:$0xff]
        %v304 = vld [vmem:[#allocation2 + $0x38] sm:$0xff]
        %v305 = vld [vmem:[#allocation2 + $0x40] sm:$0xff]
        %v306 = vld [vmem:[#allocation2 + $0x48] sm:$0xff]
        %v307 = vld [vmem:[#allocation2 + $0x50] sm:$0xff]
        %v308 = vld [vmem:[#allocation2 + $0x58] sm:$0xff]
        %vm309 = vcmask 392192
        %v311 = vsel %vm309, %v274, 0
        %v314 = vsel %vm309, %v279, 0
        %v317 = vsel %vm309, %v284, 0
        %v320 = vsel %vm309, %v289, 0
        %v323 = vsel %vm309, %v294, 0
        %325 = vmatprep.subr.mxu0 %v298
        %326 = vmatpush1.msra.mxu0 %v297
        %327 = vmatprep.subr.mxu0 %v300
        %328 = vmatpush1.msra.mxu0 %v299
        %329 = vmatprep.subr.mxu0 %v302
        %330 = vmatpush1.msra.mxu0 %v301
        %331 = vmatprep.subr.mxu0 %v304
        %332 = vmatpush1.msra.mxu0 %v303
        %333 = vmatprep.subr.mxu0 %v306
        %334 = vmatpush1.msra.mxu0 %v305
        %335 = vmatprep.subr.mxu0 %v308
        %336 = vmatpush1.msra.mxu0 %v307
        %337 = vmatprep.subr.mxu0 0.0
        %338 = vmatpush1.msra.mxu0 0.0
        %339 = vmatprep.subr.mxu0 0.0
        %340 = vmatpush1.msra.mxu0 0.0
        %341 = vmatprep.subr.mxu0 0.0
        %342 = vmatpush1.msra.mxu0 0.0
        %343 = vmatprep.subr.mxu0 0.0
        %344 = vmatpush1.msra.mxu0 0.0
        %345 = vmatprep.subr.mxu0 0.0
        %346 = vmatpush1.msra.mxu0 0.0
        %347 = vmatprep.subr.mxu0 0.0
        %348 = vmatpush1.msra.mxu0 0.0
        %349 = vmatprep.subr.mxu0 0.0
        %350 = vmatpush1.msra.mxu0 0.0
        %351 = vmatprep.subr.mxu0 0.0
        %352 = vmatpush1.msra.mxu0 0.0
        %353 = vmatprep.subr.mxu0 0.0
        %354 = vmatpush1.msra.mxu0 0.0
        %355 = vmatprep.subr.mxu0 0.0
        %356 = vmatpush1.msra.mxu0 0.0
        %357 = vmatprep.subr.mxu0 0.0
        %358 = vmatpush1.msra.mxu0 0.0
        %359 = vmatprep.subr.mxu0 0.0
        %360 = vmatpush1.msra.mxu0 0.0
        %361 = vmatprep.subr.mxu0 0.0
        %362 = vmatpush1.msra.mxu0 0.0
        %363 = vmatprep.subr.mxu0 0.0
        %364 = vmatpush1.msra.mxu0 0.0
        %365 = vmatprep.subr.mxu0 0.0
        %366 = vmatpush1.msra.mxu0 0.0
        %367 = vmatprep.subr.mxu0 0.0
        %368 = vmatpush1.msra.mxu0 0.0
        %369 = vmatprep.subr.mxu0 0.0
        %370 = vmatpush1.msra.mxu0 0.0
        %371 = vmatprep.subr.mxu0 0.0
        %372 = vmatpush1.msra.mxu0 0.0
        %373 = vmatprep.subr.mxu0 0.0
        %374 = vmatpush1.msra.mxu0 0.0
        %375 = vmatprep.subr.mxu0 0.0
        %376 = vmatpush1.msra.mxu0 0.0
        %377 = vmatprep.subr.mxu0 0.0
        %378 = vmatpush1.msra.mxu0 0.0
        %379 = vmatprep.subr.mxu0 0.0
        %380 = vmatpush1.msra.mxu0 0.0
        %381 = vmatprep.subr.mxu0 0.0
        %382 = vmatpush1.msra.mxu0 0.0
        %383 = vmatprep.subr.mxu0 0.0
        %384 = vmatpush1.msra.mxu0 0.0
        %385 = vmatprep.subr.mxu0 0.0
        %386 = vmatpush1.msra.mxu0 0.0
        %387 = vmatprep.subr.mxu0 0.0
        %388 = vmatpush1.msra.mxu0 0.0
        %389 = vmatprep.mubr.f32.mxu0 0.0
        %390 = vmatmul.mubr.f32.gmra.mrb[0].mxu0 %v311
        %v391 = vpop.f32.mrb[0].mxu0
        %v392 = vadd.f32 0.0, %v391
        %v393 = vpop.f32.mrb[0].mxu0
        %v394 = vadd.f32 0.0, %v393
        %395 = vmatprep.mubr.f32.mxu0 0.0
        %396 = vmatmul.mubr.f32.gmra.mrb[0].mxu0 %v314
        %v397 = vpop.f32.mrb[0].mxu0
        %v398 = vadd.f32 0.0, %v397
        %v399 = vpop.f32.mrb[0].mxu0
        %v400 = vadd.f32 0.0, %v399
        %401 = vmatprep.mubr.f32.mxu0 0.0
        %402 = vmatmul.mubr.f32.gmra.mrb[0].mxu0 %v317
        %v403 = vpop.f32.mrb[0].mxu0
        %v404 = vadd.f32 0.0, %v403
        %v405 = vpop.f32.mrb[0].mxu0
        %v406 = vadd.f32 0.0, %v405
        %407 = vmatprep.mubr.f32.mxu0 0.0
        %408 = vmatmul.mubr.f32.gmra.mrb[0].mxu0 %v320
        %v409 = vpop.f32.mrb[0].mxu0
        %v410 = vadd.f32 0.0, %v409
        %v411 = vpop.f32.mrb[0].mxu0
        %v412 = vadd.f32 0.0, %v411
        %413 = vmatprep.mubr.f32.mxu0 0.0
        %414 = vmatmul.mubr.f32.gmra.mrb[0].mxu0 %v323
        %v415 = vpop.f32.mrb[0].mxu0
        %v416 = vadd.f32 0.0, %v415
        %v417 = vpop.f32.mrb[0].mxu0
        %v418 = vadd.f32 0.0, %v417
        %419 = vdwg.mxu0
        %420 = vst [vmem:[%s178] sm:$0xff] %v392
        %vm421 = vcmask 261120
        %422 = vst.msk [vmem:[%s178 + $0x8] sm:$0xff] %vm421, %v394
        %423 = vst [vmem:[%s178 + $0x10] sm:$0xff] %v398
        %424 = vst.msk [vmem:[%s178 + $0x18] sm:$0xff] %vm421, %v400
        %425 = vst [vmem:[%s178 + $0x20] sm:$0xff] %v404
        %426 = vst.msk [vmem:[%s178 + $0x28] sm:$0xff] %vm421, %v406
        %427 = vst [vmem:[%s178 + $0x30] sm:$0xff] %v410
        %428 = vst.msk [vmem:[%s178 + $0x38] sm:$0xff] %vm421, %v412
        %429 = vst [vmem:[%s178 + $0x40] sm:$0xff] %v416
        %430 = vst.msk [vmem:[%s178 + $0x48] sm:$0xff] %vm421, %v418
        %s431 = sand.u32 %s94, 1
        %s432 = scalar_lea.sflag [#allocation4], %s431
        %s433 = sand.u32 %s94, 1
        %s434 = smul.addr %s433, 80
        %s435 = scalar_lea.vmem [#allocation5], %s434
        // Predicated region
        $region37: #{tpu_custom_call.1} parent=31 // pred_check
          %p436 = pneg %p104
        $region38: #{tpu_custom_call.1} parent=31 // pred_check_branch
          %438 = sbr.rel (%p436) target = $region40
        $region39: #{tpu_custom_call.1} parent=31 // pred_region
          %s440 = ssub.s32 1280, 1280
          %441 = vsyncadd %s432, %s440
          %s442 = smul.addr %s18, 10
          %s443 = smul.addr %s442, 128
          %s444 = scalar_lea.hbm %s3, %s443
          %s445 = sshll.u32 %s435, 4
          %s446 = int_to_ptr.vmem [resolvable:$true] %s445
          %451 = dma.vmem_to_hbm [thread:$0]  %s446, 1280, %s444, %s432, 256, 256, 16
        $region40: #{tpu_custom_call.1} parent=31 // pred_fallthru
          _
      $region32: #{tpu_custom_call.1} parent=5 // pred_fallthru
        _
      %p452 = scmp.le.s32.totalorder 2, %s13
      // Predicated region
      $region41: #{tpu_custom_call.1} parent=5 // pred_check
        %p453 = pneg %p452
      $region42: #{tpu_custom_call.1} parent=5 // pred_check_branch
        %455 = sbr.rel (%p453) target = $region44
      $region43: #{tpu_custom_call.1} parent=5 // pred_region
        %s456 = ssub.s32 %s13, 2
        // Predicated region
        $region45: #{tpu_custom_call.1} parent=43 // pred_check
          %p457 = pneg %p110
        $region46: #{tpu_custom_call.1} parent=43 // pred_check_branch
          %459 = sbr.rel (%p457) target = $region48
        $region47: #{tpu_custom_call.1} parent=43 // pred_region
          %s460 = sand.u32 %s95, 1
          %s461 = scalar_lea.sflag [#allocation4], %s460
          %s462 = sand.u32 %s95, 1
          %s463 = smul.addr %s462, 80
          %s464 = scalar_lea.vmem [#allocation5], %s463
          %465 = dma.done %s461, 1280
        $region48: #{tpu_custom_call.1} parent=43 // pred_fallthru
          _
      $region44: #{tpu_custom_call.1} parent=5 // pred_fallthru
        _
    $region6: #{tpu_custom_call.1} parent=1 // loop_footer
      %s17 = sadd.s32 1, %s13
    $region7: #{tpu_custom_call.1} parent=1 // loop_footer_branch
      %12 = sbr.rel target = $region3
    $region8: #{tpu_custom_call.1} parent=1 // loop_exit
      _
    %466 = vsyncpa [#allocation3], 1
    %s467 = scalar_lea.sflag [#allocation3], 1
    %468 = vsyncpa %s467, 1
    %469 = vsyncpa [#allocation4], 1
    %s470 = scalar_lea.sflag [#allocation4], 1
    %471 = vsyncpa %s470, 1

</llo_original>
